<compile_context>
chip_gen: v6e
topology: v6e:2x2x1
jax: 0.10.0
libtpu: 0.0.40
codegen_flags: <defaults>
</compile_context>

<pallas_src>
import functools

import jax
import jax.numpy as jnp
from jax.experimental import pallas as pl
from jax.experimental.pallas import tpu as pltpu


_IN_FEATURES = 784
_NUM_CLASSES = 10
_MAX_TB = 512  # batch-lane tile: multiple of 128, comfortable on 64 MiB VMEM (v7x)


def _make_mlp_kernel(num_layers):
    """Fused transposed MLP: logits^T = W_{L-1} @ relu(... W_0 @ xT + b_0 ...) + b_{L-1}."""

    def kernel(xT_ref, *refs):
        out_ref = refs[-1]
        wb_refs = refs[:-1]  # interleaved (w0, b0, w1, b1, ...)

        h = xT_ref[...]                              # (in, TB) bf16, batch on lanes
        for i in range(num_layers):
            w = wb_refs[2 * i][...]                  # (out_i, in_i) bf16
            b = wb_refs[2 * i + 1][...]              # (out_i, 1)    f32
            h = jnp.dot(w, h, preferred_element_type=jnp.float32) + b
            if i < num_layers - 1:
                h = jnp.maximum(h, 0.0)              # ReLU on hidden layers only
                h = h.astype(jnp.bfloat16)           # bf16 operands for next MXU pass
        out_ref[...] = h.astype(out_ref.dtype)       # (10, TB) f32 logits^T

    return kernel


def _log_softmax_kernel(logits_ref, out_ref, *, valid_b):
    """log_softmax over dim=0 of (B, 10) == over the lane axis of (10, B_pad)."""
    z = logits_ref[...]                                          # (10, B_pad) f32
    col = jax.lax.broadcasted_iota(jnp.int32, z.shape, 1)
    zc = jnp.where(col < valid_b, z, -jnp.inf)                   # mask padded batch cols
    m = jnp.max(zc, axis=-1, keepdims=True)
    s = jnp.sum(jnp.exp(zc - m), axis=-1, keepdims=True)
    out_ref[...] = z - (m + jnp.log(s))


@jax.jit
def mlp_forward(x, *flat_params):
    """x: (B, 1, 28, 28) or (B, 784).  flat_params: w0, b0, w1, b1, ...

    w_i: (out_i, in_i) bf16 (PyTorch nn.Linear layout), b_i: (out_i, 1) f32.
    Returns (B, 10) f32 log-probabilities (log_softmax over dim=0, the batch).
    """
    x2 = x.reshape(-1, _IN_FEATURES)
    B = x2.shape[0]
    num_layers = len(flat_params) // 2
    out_dim = flat_params[-2].shape[0]

    # Batch tiling (lane-dense): TB divides B_pad and is a multiple of 128
    # unless the whole (small) batch fits in a single block.
    if B <= _MAX_TB:
        tb, b_pad = B, B
    else:
        tb = _MAX_TB
        b_pad = ((B + tb - 1) // tb) * tb

    xT = x2.astype(jnp.bfloat16).T                   # (784, B), layout plumbing in XLA
    if b_pad != B:
        xT = jnp.pad(xT, ((0, 0), (0, b_pad - B)))

    in_specs = [pl.BlockSpec((_IN_FEATURES, tb), lambda i: (0, i))]
    for p in flat_params:
        # Constant block index -> weights/biases stay resident in VMEM (no re-DMA).
        in_specs.append(pl.BlockSpec(p.shape, lambda i: (0, 0)))

    logits_t = pl.pallas_call(
        _make_mlp_kernel(num_layers),
        out_shape=jax.ShapeDtypeStruct((out_dim, b_pad), jnp.float32),
        grid=(b_pad // tb,),
        in_specs=in_specs,
        out_specs=pl.BlockSpec((out_dim, tb), lambda i: (0, i)),
        compiler_params=pltpu.CompilerParams(
            dimension_semantics=("parallel",)),      # megacore sharding on v7x
    )(xT, *flat_params)

    # Second tiny pass: cross-tile reduction (log_softmax over the batch axis).
    # The whole logit slab is only (10, B_pad) f32 so it trivially fits VMEM.
    logp_t = pl.pallas_call(
        functools.partial(_log_softmax_kernel, valid_b=B),
        out_shape=jax.ShapeDtypeStruct((out_dim, b_pad), jnp.float32),
        in_specs=[pl.BlockSpec(memory_space=pltpu.MemorySpace.VMEM)],
        out_specs=pl.BlockSpec(memory_space=pltpu.MemorySpace.VMEM),
    )(logits_t)

    return logp_t[:, :B].T                           # back to PyTorch's (B, 10)


def init_mlp_params(key, hidden, layer):
    """Deterministic init mimicking nn.Linear (uniform +-1/sqrt(fan_in)).

    Weights stored in PyTorch layout (out_features, in_features), cast bf16
    for the MXU; biases stored as (out_features, 1) f32.
    """
    if layer == 1:
        dims = [(_IN_FEATURES, _NUM_CLASSES)]
    else:
        dims = ([(_IN_FEATURES, hidden)]
                + [(hidden, hidden)] * (layer - 2)
                + [(hidden, _NUM_CLASSES)])

    flat = []
    for fan_in, fan_out in dims:
        key, kw, kb = jax.random.split(key, 3)
        bound = 1.0 / jnp.sqrt(jnp.float32(fan_in))
        w = jax.random.uniform(kw, (fan_out, fan_in), jnp.float32, -bound, bound)
        b = jax.random.uniform(kb, (fan_out, 1), jnp.float32, -bound, bound)
        flat += [w.astype(jnp.bfloat16), b]
    return flat


def _reference_forward(x, flat_params):
    """Pure-JAX reference using the same bf16-operand / f32-accumulate math."""
    h = x.reshape(-1, _IN_FEATURES).astype(jnp.float32)
    num_layers = len(flat_params) // 2
    for i in range(num_layers):
        w = flat_params[2 * i]          # (out, in) bf16
        b = flat_params[2 * i + 1]      # (out, 1)  f32
        h = jnp.dot(h.astype(jnp.bfloat16), w.T,
                    preferred_element_type=jnp.float32) + b[:, 0]
        if i < num_layers - 1:
            h = jnp.maximum(h, 0.0)
    return jax.nn.log_softmax(h, axis=0)


if __name__ == "__main__":
    key = jax.random.PRNGKey(0)
    k_x, k_p = jax.random.split(key)

    # Small MNIST-like batch: B=8, NCHW (8, 1, 28, 28); hidden=32, 3 layers.
    x = jax.random.normal(k_x, (8, 1, 28, 28), dtype=jnp.float32)
    flat_params = init_mlp_params(k_p, hidden=32, layer=3)

    out = mlp_forward(x, *flat_params)
    out = jax.block_until_ready(out)

    ref = _reference_forward(x, flat_params)
    assert out.shape == (8, 10), out.shape
    assert jnp.allclose(out, ref, atol=2e-3, rtol=2e-3), (
        "mismatch vs reference, max abs err = "
        + str(float(jnp.max(jnp.abs(out - ref)))))

    print("KERNEL_OK")
</pallas_src>

<mosaic_0001>
module attributes {stable_mosaic.version = 11 : i64} {
  func.func @_log_softmax_kernel(%arg0: memref<10x8xf32, #tpu.memory_space<vmem>>, %arg1: memref<10x8xf32, #tpu.memory_space<vmem>>) attributes {dimension_semantics = [], scalar_prefetch = 0 : i64, scratch_operands = 0 : i64, tpu.core_type = #tpu.core_type<tc>} {
    %c0 = arith.constant 0 : index
    %c0_0 = arith.constant 0 : index
    %0 = vector.load %arg0[%c0, %c0_0] : memref<10x8xf32, #tpu.memory_space<vmem>>, vector<10x8xf32>
    %1 = tpu.iota {dimensions = array<i32: 1>} : vector<10x8xi32>
    %c8_i32 = arith.constant 8 : i32
    %2 = vector.broadcast %c8_i32 : i32 to vector<10x8xi32>
    %3 = arith.cmpi slt, %1, %2 : vector<10x8xi32>
    %cst = arith.constant 0xFF800000 : f32
    %4 = vector.broadcast %cst : f32 to vector<10x8xf32>
    %5 = arith.select %3, %0, %4 : vector<10x8xi1>, vector<10x8xf32>
    %cst_1 = arith.constant dense<0xFF800000> : vector<10xf32>
    %6 = vector.multi_reduction <maximumf>, %5, %cst_1 [1] : vector<10x8xf32> to vector<10xf32>
    %7 = vector.shape_cast %6 : vector<10xf32> to vector<10x1xf32>
    %8 = vector.broadcast %7 : vector<10x1xf32> to vector<10x8xf32>
    %9 = arith.subf %5, %8 : vector<10x8xf32>
    %10 = math.exp %9 : vector<10x8xf32>
    %cst_2 = arith.constant dense<0.000000e+00> : vector<10xf32>
    %11 = vector.multi_reduction <add>, %10, %cst_2 [1] : vector<10x8xf32> to vector<10xf32>
    %12 = vector.shape_cast %11 : vector<10xf32> to vector<10x1xf32>
    %13 = math.log %12 : vector<10x1xf32>
    %14 = arith.addf %7, %13 : vector<10x1xf32>
    %15 = vector.broadcast %14 : vector<10x1xf32> to vector<10x8xf32>
    %16 = arith.subf %0, %15 : vector<10x8xf32>
    %c0_3 = arith.constant 0 : index
    %c0_4 = arith.constant 0 : index
    %17 = vector.load %arg1[%c0_3, %c0_4] : memref<10x8xf32, #tpu.memory_space<vmem>>, vector<10x8xf32>
    tpu.vector_store %arg1[%c0_3, %c0_4], %16 {strides = array<i32>} : memref<10x8xf32, #tpu.memory_space<vmem>>, vector<10x8xf32>,
    return
  }
}

module attributes {stable_mosaic.version = 11 : i64} {
  func.func @kernel(%arg0: i32, %arg1: memref<784x8xbf16, #tpu.memory_space<vmem>>, %arg2: memref<32x784xbf16, #tpu.memory_space<vmem>>, %arg3: memref<32x1xf32, #tpu.memory_space<vmem>>, %arg4: memref<32x32xbf16, #tpu.memory_space<vmem>>, %arg5: memref<32x1xf32, #tpu.memory_space<vmem>>, %arg6: memref<10x32xbf16, #tpu.memory_space<vmem>>, %arg7: memref<10x1xf32, #tpu.memory_space<vmem>>, %arg8: memref<10x8xf32, #tpu.memory_space<vmem>>) attributes {dimension_semantics = [#tpu.dimension_semantics<parallel>], iteration_bounds = array<i64: 1>, scalar_prefetch = 0 : i64, scratch_operands = 0 : i64, tpu.core_type = #tpu.core_type<tc>, window_params = [{transform_indices = @transform_0, window_bounds = array<i64: 784, 8>}, {pipeline_mode = #tpu.pipeline_mode<synchronous>, transform_indices = @transform_1, window_bounds = array<i64: 32, 784>}, {pipeline_mode = #tpu.pipeline_mode<synchronous>, transform_indices = @transform_2, window_bounds = array<i64: 32, 1>}, {pipeline_mode = #tpu.pipeline_mode<synchronous>, transform_indices = @transform_3, window_bounds = array<i64: 32, 32>}, {pipeline_mode = #tpu.pipeline_mode<synchronous>, transform_indices = @transform_4, window_bounds = array<i64: 32, 1>}, {pipeline_mode = #tpu.pipeline_mode<synchronous>, transform_indices = @transform_5, window_bounds = array<i64: 10, 32>}, {pipeline_mode = #tpu.pipeline_mode<synchronous>, transform_indices = @transform_6, window_bounds = array<i64: 10, 1>}, {transform_indices = @transform_7, window_bounds = array<i64: 10, 8>}]} {
    %c0 = arith.constant 0 : index
    %c0_0 = arith.constant 0 : index
    %0 = vector.load %arg1[%c0, %c0_0] : memref<784x8xbf16, #tpu.memory_space<vmem>>, vector<784x8xbf16>
    %c0_1 = arith.constant 0 : index
    %c0_2 = arith.constant 0 : index
    %1 = vector.load %arg2[%c0_1, %c0_2] : memref<32x784xbf16, #tpu.memory_space<vmem>>, vector<32x784xbf16>
    %c0_3 = arith.constant 0 : index
    %c0_4 = arith.constant 0 : index
    %2 = vector.load %arg3[%c0_3, %c0_4] : memref<32x1xf32, #tpu.memory_space<vmem>>, vector<32x1xf32>
    %cst = arith.constant dense<0.000000e+00> : vector<32x8xf32>
    %3 = tpu.matmul %1, %0, %cst {dimension_numbers = #tpu.dot_dimension_numbers<[1], [0], [0], [1], [0, 0, 1, 1], [], []>} : vector<32x784xbf16>, vector<784x8xbf16>, vector<32x8xf32> -> vector<32x8xf32>
    %4 = vector.broadcast %2 : vector<32x1xf32> to vector<32x8xf32>
    %5 = arith.addf %3, %4 : vector<32x8xf32>
    %cst_5 = arith.constant 0.000000e+00 : f32
    %6 = vector.broadcast %cst_5 : f32 to vector<32x8xf32>
    %7 = arith.maximumf %5, %6 : vector<32x8xf32>
    %8 = arith.truncf %7 : vector<32x8xf32> to vector<32x8xbf16>
    %c0_6 = arith.constant 0 : index
    %c0_7 = arith.constant 0 : index
    %9 = vector.load %arg4[%c0_6, %c0_7] : memref<32x32xbf16, #tpu.memory_space<vmem>>, vector<32x32xbf16>
    %c0_8 = arith.constant 0 : index
    %c0_9 = arith.constant 0 : index
    %10 = vector.load %arg5[%c0_8, %c0_9] : memref<32x1xf32, #tpu.memory_space<vmem>>, vector<32x1xf32>
    %cst_10 = arith.constant dense<0.000000e+00> : vector<32x8xf32>
    %11 = tpu.matmul %9, %8, %cst_10 {dimension_numbers = #tpu.dot_dimension_numbers<[1], [0], [0], [1], [0, 0, 1, 1], [], []>} : vector<32x32xbf16>, vector<32x8xbf16>, vector<32x8xf32> -> vector<32x8xf32>
    %12 = vector.broadcast %10 : vector<32x1xf32> to vector<32x8xf32>
    %13 = arith.addf %11, %12 : vector<32x8xf32>
    %cst_11 = arith.constant 0.000000e+00 : f32
    %14 = vector.broadcast %cst_11 : f32 to vector<32x8xf32>
    %15 = arith.maximumf %13, %14 : vector<32x8xf32>
    %16 = arith.truncf %15 : vector<32x8xf32> to vector<32x8xbf16>
    %c0_12 = arith.constant 0 : index
    %c0_13 = arith.constant 0 : index
    %17 = vector.load %arg6[%c0_12, %c0_13] : memref<10x32xbf16, #tpu.memory_space<vmem>>, vector<10x32xbf16>
    %c0_14 = arith.constant 0 : index
    %c0_15 = arith.constant 0 : index
    %18 = vector.load %arg7[%c0_14, %c0_15] : memref<10x1xf32, #tpu.memory_space<vmem>>, vector<10x1xf32>
    %cst_16 = arith.constant dense<0.000000e+00> : vector<10x8xf32>
    %19 = tpu.matmul %17, %16, %cst_16 {dimension_numbers = #tpu.dot_dimension_numbers<[1], [0], [0], [1], [0, 0, 1, 1], [], []>} : vector<10x32xbf16>, vector<32x8xbf16>, vector<10x8xf32> -> vector<10x8xf32>
    %20 = vector.broadcast %18 : vector<10x1xf32> to vector<10x8xf32>
    %21 = arith.addf %19, %20 : vector<10x8xf32>
    %c0_17 = arith.constant 0 : index
    %c0_18 = arith.constant 0 : index
    %22 = vector.load %arg8[%c0_17, %c0_18] : memref<10x8xf32, #tpu.memory_space<vmem>>, vector<10x8xf32>
    tpu.vector_store %arg8[%c0_17, %c0_18], %21 {strides = array<i32>} : memref<10x8xf32, #tpu.memory_space<vmem>>, vector<10x8xf32>,
    return
  }
  func.func @transform_0(%arg0: i32) -> (i32, i32) {
    %c0_i32 = arith.constant 0 : i32
    %c0_i32_0 = arith.constant 0 : i32
    return %c0_i32, %arg0 : i32, i32
  }
  func.func @transform_1(%arg0: i32) -> (i32, i32) {
    %c0_i32 = arith.constant 0 : i32
    %c0_i32_0 = arith.constant 0 : i32
    %c0_i32_1 = arith.constant 0 : i32
    return %c0_i32, %c0_i32_0 : i32, i32
  }
  func.func @transform_2(%arg0: i32) -> (i32, i32) {
    %c0_i32 = arith.constant 0 : i32
    %c0_i32_0 = arith.constant 0 : i32
    %c0_i32_1 = arith.constant 0 : i32
    return %c0_i32, %c0_i32_0 : i32, i32
  }
  func.func @transform_3(%arg0: i32) -> (i32, i32) {
    %c0_i32 = arith.constant 0 : i32
    %c0_i32_0 = arith.constant 0 : i32
    %c0_i32_1 = arith.constant 0 : i32
    return %c0_i32, %c0_i32_0 : i32, i32
  }
  func.func @transform_4(%arg0: i32) -> (i32, i32) {
    %c0_i32 = arith.constant 0 : i32
    %c0_i32_0 = arith.constant 0 : i32
    %c0_i32_1 = arith.constant 0 : i32
    return %c0_i32, %c0_i32_0 : i32, i32
  }
  func.func @transform_5(%arg0: i32) -> (i32, i32) {
    %c0_i32 = arith.constant 0 : i32
    %c0_i32_0 = arith.constant 0 : i32
    %c0_i32_1 = arith.constant 0 : i32
    return %c0_i32, %c0_i32_0 : i32, i32
  }
  func.func @transform_6(%arg0: i32) -> (i32, i32) {
    %c0_i32 = arith.constant 0 : i32
    %c0_i32_0 = arith.constant 0 : i32
    %c0_i32_1 = arith.constant 0 : i32
    return %c0_i32, %c0_i32_0 : i32, i32
  }
  func.func @transform_7(%arg0: i32) -> (i32, i32) {
    %c0_i32 = arith.constant 0 : i32
    %c0_i32_0 = arith.constant 0 : i32
    return %c0_i32, %arg0 : i32, i32
  }
}

</mosaic_0001>

<llo_original>
// kernel: mlp_forward.3
$region0: #{mlp_forward.3}
  #allocation0 [shape = 'u32[]', space=smem, size = 0x4, offset = 0x4, fixed_abs, tag = 'smem constant byte address 0x4 - core index']
  #allocation1 [shape = 'u32[144,128]{1,0:T(1,128)}', space=vmem, size = 0x12000, scoped, tag = 'internal scratch']
  %s0 = inlined_call_operand.vmem [shape: f32[10,8], index: 0, kind: input, shape index: {}]
  %s1 = inlined_call_operand.vmem [shape: f32[10,8], index: 1, kind: output, shape index: {}]
  %s2 = sld [smem:[#allocation0]]
  $region14: #{mlp_forward.3} parent=0
    _
  %s4 = ssub.s32 1, %s2
  %s5 = scalar_select 0, %s4, %s2
  // Predicated region
  $region2: #{mlp_forward.3} parent=0 // pred_check
    _
  $region3: #{mlp_forward.3} parent=0 // pred_check_branch
    %7 = sbr.rel (0) target = $region5
  $region4: #{mlp_forward.3} parent=0 // pred_region
    _
  $region5: #{mlp_forward.3} parent=0 // pred_fallthru
    _
  %v8 = vld [vmem:[%s0] sm:$0xff]
  %v9 = vld [vmem:[%s0 + $0x8] sm:$0x3]
  %v10 = vlaneseq
  %v11 = vand.u32 %v10, 127
  %vm12 = vcmp.lt.s32.totalorder %v11, 8
  %v13 = vsel %vm12, %v8, -inf
  %v14 = vsel %vm12, %v9, -inf
  %vm15 = vcmask 64512
  %v16 = vsel %vm15, %v13, -inf
  %17 = vmax.xlane.f32.xlu0 %v16
  %v18 = vpop.xlane.xlu0 %17
  %vm19 = vcmask 58368
  %v20 = vsel %vm19, %v14, -inf
  %21 = vmax.xlane.f32.xlu0 %v20
  %v22 = vpop.xlane.xlu0 %21
  %v23 = vsub.f32 %v13, %v18
  %v24 = vsub.f32 %v14, %v22
  %v25 = vmul.f32 %v23, 1.442695
  %v26 = vpow.pop %v25
  %v27 = vmul.f32 %v24, 1.442695
  %v28 = vpow.pop %v27
  %v29 = vsel %vm15, %v26, 0.0
  %30 = vadd.xlane.f32.xlu0 %v29
  %v31 = vpop.xlane.xlu0 %30
  %v32 = vsel %vm19, %v28, 0.0
  %33 = vadd.xlane.f32.xlu0 %v32
  %v34 = vpop.xlane.xlu0 %33
  %v35 = vlog2.pop %v31
  %v36 = vmul.f32 %v35, 0.6931472
  %v37 = vlog2.pop %v34
  %v38 = vmul.f32 %v37, 0.6931472
  %v39 = vadd.f32 %v18, %v36
  %v40 = vadd.f32 %v22, %v38
  %v41 = vsub.f32 %v8, %v39
  %v42 = vsub.f32 %v9, %v40
  %43 = vst.msk [vmem:[%s1] sm:$0xff] %vm15, %v41
  %44 = vst.msk [vmem:[%s1 + $0x8] sm:$0x3] %vm19, %v42
  // Predicated region
  $region6: #{mlp_forward.3} parent=0 // pred_check
    _
  $region7: #{mlp_forward.3} parent=0 // pred_check_branch
    %46 = sbr.rel (0) target = $region9
  $region8: #{mlp_forward.3} parent=0 // pred_region
    _
  $region9: #{mlp_forward.3} parent=0 // pred_fallthru
    _
  // Predicated region
  $region10: #{mlp_forward.3} parent=0 // pred_check
    _
  $region11: #{mlp_forward.3} parent=0 // pred_check_branch
    %48 = sbr.rel (0) target = $region13
  $region12: #{mlp_forward.3} parent=0 // pred_region
    _
  $region13: #{mlp_forward.3} parent=0 // pred_fallthru
    _

// kernel: mlp_forward.2
$region0: #{mlp_forward.2}
  #allocation0 [shape = 'u32[]', space=smem, size = 0x4, offset = 0x4, fixed_abs, tag = 'smem constant byte address 0x4 - core index']
  #allocation1 [shape = 'u32[144,128]{1,0:T(1,128)}', space=vmem, size = 0x12000, scoped, tag = 'internal scratch']
  %s0 = inlined_call_operand.vmem [shape: bf16[784,8], index: 0, kind: input, shape index: {}]
  %s1 = inlined_call_operand.vmem [shape: bf16[32,784], index: 1, kind: input, shape index: {}]
  %s2 = inlined_call_operand.vmem [shape: f32[32,1], index: 2, kind: input, shape index: {}]
  %s3 = inlined_call_operand.vmem [shape: bf16[32,32], index: 3, kind: input, shape index: {}]
  %s4 = inlined_call_operand.vmem [shape: f32[32,1], index: 4, kind: input, shape index: {}]
  %s5 = inlined_call_operand.vmem [shape: bf16[10,32], index: 5, kind: input, shape index: {}]
  %s6 = inlined_call_operand.vmem [shape: f32[10,1], index: 6, kind: input, shape index: {}]
  %s7 = inlined_call_operand.vmem [shape: f32[10,8], index: 7, kind: output, shape index: {}]
  %s8 = sld [smem:[#allocation0]]
  $region38: #{mlp_forward.2} parent=0
    _
  %s10 = ssub.s32 1, %s8
  %s11 = scalar_select 0, %s10, %s8
  // Predicated region
  $region2: #{mlp_forward.2} parent=0 // pred_check
    _
  $region3: #{mlp_forward.2} parent=0 // pred_check_branch
    %13 = sbr.rel (0) target = $region5
  $region4: #{mlp_forward.2} parent=0 // pred_region
    _
  $region5: #{mlp_forward.2} parent=0 // pred_fallthru
    _
  // Predicated region
  $region6: #{mlp_forward.2} parent=0 // pred_check
    _
  $region7: #{mlp_forward.2} parent=0 // pred_check_branch
    %15 = sbr.rel (0) target = $region9
  $region8: #{mlp_forward.2} parent=0 // pred_region
    _
  $region9: #{mlp_forward.2} parent=0 // pred_fallthru
    _
  // Predicated region
  $region10: #{mlp_forward.2} parent=0 // pred_check
    _
  $region11: #{mlp_forward.2} parent=0 // pred_check_branch
    %17 = sbr.rel (0) target = $region13
  $region12: #{mlp_forward.2} parent=0 // pred_region
    _
  $region13: #{mlp_forward.2} parent=0 // pred_fallthru
    _
  // Predicated region
  $region14: #{mlp_forward.2} parent=0 // pred_check
    _
  $region15: #{mlp_forward.2} parent=0 // pred_check_branch
    %19 = sbr.rel (0) target = $region17
  $region16: #{mlp_forward.2} parent=0 // pred_region
    _
  $region17: #{mlp_forward.2} parent=0 // pred_fallthru
    _
  // Predicated region
  $region18: #{mlp_forward.2} parent=0 // pred_check
    _
  $region19: #{mlp_forward.2} parent=0 // pred_check_branch
    %21 = sbr.rel (0) target = $region21
  $region20: #{mlp_forward.2} parent=0 // pred_region
    _
  $region21: #{mlp_forward.2} parent=0 // pred_fallthru
    _
  // Predicated region
  $region22: #{mlp_forward.2} parent=0 // pred_check
    _
  $region23: #{mlp_forward.2} parent=0 // pred_check_branch
    %23 = sbr.rel (0) target = $region25
  $region24: #{mlp_forward.2} parent=0 // pred_region
    _
  $region25: #{mlp_forward.2} parent=0 // pred_fallthru
    _
  // Predicated region
  $region26: #{mlp_forward.2} parent=0 // pred_check
    _
  $region27: #{mlp_forward.2} parent=0 // pred_check_branch
    %25 = sbr.rel (0) target = $region29
  $region28: #{mlp_forward.2} parent=0 // pred_region
    _
  $region29: #{mlp_forward.2} parent=0 // pred_fallthru
    _
  %v27 = vld [vmem:[%s0] sm:$0xf]
  %v28 = vld [vmem:[%s0 + $0x4] sm:$0xf]
  %v29 = vld [vmem:[%s0 + $0x8] sm:$0xf]
  %v30 = vld [vmem:[%s0 + $0xc] sm:$0xf]
  %v31 = vld [vmem:[%s0 + $0x10] sm:$0xf]
  %v32 = vld [vmem:[%s0 + $0x14] sm:$0xf]
  %v33 = vld [vmem:[%s0 + $0x18] sm:$0xf]
  %v34 = vld [vmem:[%s0 + $0x1c] sm:$0xf]
  %v35 = vld [vmem:[%s0 + $0x20] sm:$0xf]
  %v36 = vld [vmem:[%s0 + $0x24] sm:$0xf]
  %v37 = vld [vmem:[%s0 + $0x28] sm:$0xf]
  %v38 = vld [vmem:[%s0 + $0x2c] sm:$0xf]
  %v39 = vld [vmem:[%s0 + $0x30] sm:$0xf]
  %v40 = vld [vmem:[%s0 + $0x34] sm:$0xf]
  %v41 = vld [vmem:[%s0 + $0x38] sm:$0xf]
  %v42 = vld [vmem:[%s0 + $0x3c] sm:$0xf]
  %v43 = vld [vmem:[%s0 + $0x40] sm:$0xf]
  %v44 = vld [vmem:[%s0 + $0x44] sm:$0xf]
  %v45 = vld [vmem:[%s0 + $0x48] sm:$0xf]
  %v46 = vld [vmem:[%s0 + $0x4c] sm:$0xf]
  %v47 = vld [vmem:[%s0 + $0x50] sm:$0xf]
  %v48 = vld [vmem:[%s0 + $0x54] sm:$0xf]
  %v49 = vld [vmem:[%s0 + $0x58] sm:$0xf]
  %v50 = vld [vmem:[%s0 + $0x5c] sm:$0xf]
  %v51 = vld [vmem:[%s0 + $0x60] sm:$0xf]
  %v52 = vld [vmem:[%s0 + $0x64] sm:$0xf]
  %v53 = vld [vmem:[%s0 + $0x68] sm:$0xf]
  %v54 = vld [vmem:[%s0 + $0x6c] sm:$0xf]
  %v55 = vld [vmem:[%s0 + $0x70] sm:$0xf]
  %v56 = vld [vmem:[%s0 + $0x74] sm:$0xf]
  %v57 = vld [vmem:[%s0 + $0x78] sm:$0xf]
  %v58 = vld [vmem:[%s0 + $0x7c] sm:$0xf]
  %v59 = vld [vmem:[%s0 + $0x80] sm:$0xf]
  %v60 = vld [vmem:[%s0 + $0x84] sm:$0xf]
  %v61 = vld [vmem:[%s0 + $0x88] sm:$0xf]
  %v62 = vld [vmem:[%s0 + $0x8c] sm:$0xf]
  %v63 = vld [vmem:[%s0 + $0x90] sm:$0xf]
  %v64 = vld [vmem:[%s0 + $0x94] sm:$0xf]
  %v65 = vld [vmem:[%s0 + $0x98] sm:$0xf]
  %v66 = vld [vmem:[%s0 + $0x9c] sm:$0xf]
  %v67 = vld [vmem:[%s0 + $0xa0] sm:$0xf]
  %v68 = vld [vmem:[%s0 + $0xa4] sm:$0xf]
  %v69 = vld [vmem:[%s0 + $0xa8] sm:$0xf]
  %v70 = vld [vmem:[%s0 + $0xac] sm:$0xf]
  %v71 = vld [vmem:[%s0 + $0xb0] sm:$0xf]
  %v72 = vld [vmem:[%s0 + $0xb4] sm:$0xf]
  %v73 = vld [vmem:[%s0 + $0xb8] sm:$0xf]
  %v74 = vld [vmem:[%s0 + $0xbc] sm:$0xf]
  %v75 = vld [vmem:[%s0 + $0xc0] sm:$0xf]
  %v76 = vld [vmem:[%s0 + $0xc4] sm:$0xf]
  %v77 = vld [vmem:[%s0 + $0xc8] sm:$0xf]
  %v78 = vld [vmem:[%s0 + $0xcc] sm:$0xf]
  %v79 = vld [vmem:[%s0 + $0xd0] sm:$0xf]
  %v80 = vld [vmem:[%s0 + $0xd4] sm:$0xf]
  %v81 = vld [vmem:[%s0 + $0xd8] sm:$0xf]
  %v82 = vld [vmem:[%s0 + $0xdc] sm:$0xf]
  %v83 = vld [vmem:[%s0 + $0xe0] sm:$0xf]
  %v84 = vld [vmem:[%s0 + $0xe4] sm:$0xf]
  %v85 = vld [vmem:[%s0 + $0xe8] sm:$0xf]
  %v86 = vld [vmem:[%s0 + $0xec] sm:$0xf]
  %v87 = vld [vmem:[%s0 + $0xf0] sm:$0xf]
  %v88 = vld [vmem:[%s0 + $0xf4] sm:$0xf]
  %v89 = vld [vmem:[%s0 + $0xf8] sm:$0xf]
  %v90 = vld [vmem:[%s0 + $0xfc] sm:$0xf]
  %v91 = vld [vmem:[%s0 + $0x100] sm:$0xf]
  %v92 = vld [vmem:[%s0 + $0x104] sm:$0xf]
  %v93 = vld [vmem:[%s0 + $0x108] sm:$0xf]
  %v94 = vld [vmem:[%s0 + $0x10c] sm:$0xf]
  %v95 = vld [vmem:[%s0 + $0x110] sm:$0xf]
  %v96 = vld [vmem:[%s0 + $0x114] sm:$0xf]
  %v97 = vld [vmem:[%s0 + $0x118] sm:$0xf]
  %v98 = vld [vmem:[%s0 + $0x11c] sm:$0xf]
  %v99 = vld [vmem:[%s0 + $0x120] sm:$0xf]
  %v100 = vld [vmem:[%s0 + $0x124] sm:$0xf]
  %v101 = vld [vmem:[%s0 + $0x128] sm:$0xf]
  %v102 = vld [vmem:[%s0 + $0x12c] sm:$0xf]
  %v103 = vld [vmem:[%s0 + $0x130] sm:$0xf]
  %v104 = vld [vmem:[%s0 + $0x134] sm:$0xf]
  %v105 = vld [vmem:[%s0 + $0x138] sm:$0xf]
  %v106 = vld [vmem:[%s0 + $0x13c] sm:$0xf]
  %v107 = vld [vmem:[%s0 + $0x140] sm:$0xf]
  %v108 = vld [vmem:[%s0 + $0x144] sm:$0xf]
  %v109 = vld [vmem:[%s0 + $0x148] sm:$0xf]
  %v110 = vld [vmem:[%s0 + $0x14c] sm:$0xf]
  %v111 = vld [vmem:[%s0 + $0x150] sm:$0xf]
  %v112 = vld [vmem:[%s0 + $0x154] sm:$0xf]
  %v113 = vld [vmem:[%s0 + $0x158] sm:$0xf]
  %v114 = vld [vmem:[%s0 + $0x15c] sm:$0xf]
  %v115 = vld [vmem:[%s0 + $0x160] sm:$0xf]
  %v116 = vld [vmem:[%s0 + $0x164] sm:$0xf]
  %v117 = vld [vmem:[%s0 + $0x168] sm:$0xf]
  %v118 = vld [vmem:[%s0 + $0x16c] sm:$0xf]
  %v119 = vld [vmem:[%s0 + $0x170] sm:$0xf]
  %v120 = vld [vmem:[%s0 + $0x174] sm:$0xf]
  %v121 = vld [vmem:[%s0 + $0x178] sm:$0xf]
  %v122 = vld [vmem:[%s0 + $0x17c] sm:$0xf]
  %v123 = vld [vmem:[%s0 + $0x180] sm:$0xf]
  %v124 = vld [vmem:[%s0 + $0x184] sm:$0xf]
  %v125 = vld [vmem:[%s1] sm:$0xff]
  %v126 = vld [vmem:[%s1 + $0x8] sm:$0xff]
  %v127 = vld [vmem:[%s1 + $0x10] sm:$0xff]
  %v128 = vld [vmem:[%s1 + $0x18] sm:$0xf]
  %v129 = vld [vmem:[%s1 + $0x1c] sm:$0xff]
  %v130 = vld [vmem:[%s1 + $0x24] sm:$0xff]
  %v131 = vld [vmem:[%s1 + $0x2c] sm:$0xff]
  %v132 = vld [vmem:[%s1 + $0x34] sm:$0xf]
  %v133 = vld [vmem:[%s1 + $0x38] sm:$0xff]
  %v134 = vld [vmem:[%s1 + $0x40] sm:$0xff]
  %v135 = vld [vmem:[%s1 + $0x48] sm:$0xff]
  %v136 = vld [vmem:[%s1 + $0x50] sm:$0xf]
  %v137 = vld [vmem:[%s1 + $0x54] sm:$0xff]
  %v138 = vld [vmem:[%s1 + $0x5c] sm:$0xff]
  %v139 = vld [vmem:[%s1 + $0x64] sm:$0xff]
  %v140 = vld [vmem:[%s1 + $0x6c] sm:$0xf]
  %v141 = vld [vmem:[%s2] sm:$0xff]
  %v142 = vld [vmem:[%s2 + $0x8] sm:$0xff]
  %v143 = vld [vmem:[%s2 + $0x10] sm:$0xff]
  %v144 = vld [vmem:[%s2 + $0x18] sm:$0xff]
  %146 = vset.pattern.permute.xlu0 0
  %147 = vperm.xlu0 %146, %v141
  %v148 = vpop.permute.xlu0 %147
  %151 = vset.pattern.permute.xlu0 0
  %152 = vperm.xlu0 %151, %v142
  %v153 = vpop.permute.xlu0 %152
  %156 = vset.pattern.permute.xlu0 0
  %157 = vperm.xlu0 %156, %v143
  %v158 = vpop.permute.xlu0 %157
  %161 = vset.pattern.permute.xlu0 0
  %162 = vperm.xlu0 %161, %v144
  %v163 = vpop.permute.xlu0 %162
  %v181 = vunpack.c.l.b16 %v125
  %v182 = vunpack.c.h.b16 %v125
  %v183 = vunpack.c.l.b16 %v126
  %v184 = vunpack.c.h.b16 %v126
  %v185 = vunpack.c.l.b16 %v127
  %v186 = vunpack.c.h.b16 %v127
  %v187 = vunpack.c.l.b16 %v128
  %v188 = vunpack.c.l.b16 %v129
  %v189 = vunpack.c.h.b16 %v129
  %v190 = vunpack.c.l.b16 %v130
  %v191 = vunpack.c.h.b16 %v130
  %v192 = vunpack.c.l.b16 %v131
  %v193 = vunpack.c.h.b16 %v131
  %v194 = vunpack.c.l.b16 %v132
  %v195 = vunpack.c.l.b16 %v133
  %v196 = vunpack.c.h.b16 %v133
  %v197 = vunpack.c.l.b16 %v134
  %v198 = vunpack.c.h.b16 %v134
  %v199 = vunpack.c.l.b16 %v135
  %v200 = vunpack.c.h.b16 %v135
  %v201 = vunpack.c.l.b16 %v136
  %v202 = vunpack.c.l.b16 %v137
  %v203 = vunpack.c.h.b16 %v137
  %v204 = vunpack.c.l.b16 %v138
  %v205 = vunpack.c.h.b16 %v138
  %v206 = vunpack.c.l.b16 %v139
  %v207 = vunpack.c.h.b16 %v139
  %v208 = vunpack.c.l.b16 %v140
  %v209 = vpack.c.b16 %v188, %v181
  %v210 = vpack.c.b16 %v189, %v182
  %v211 = vpack.c.b16 %v190, %v183
  %v212 = vpack.c.b16 %v191, %v184
  %v213 = vpack.c.b16 %v192, %v185
  %v214 = vpack.c.b16 %v193, %v186
  %v215 = vpack.c.b16 %v194, %v187
  %v216 = vpack.c.b16 %v202, %v195
  %v217 = vpack.c.b16 %v203, %v196
  %v218 = vpack.c.b16 %v204, %v197
  %v219 = vpack.c.b16 %v205, %v198
  %v220 = vpack.c.b16 %v206, %v199
  %v221 = vpack.c.b16 %v207, %v200
  %v222 = vpack.c.b16 %v208, %v201
  %v333 = vunpack.c.l.b16 %v27
  %v334 = vunpack.c.l.b16 %v28
  %v335 = vunpack.c.l.b16 %v29
  %v336 = vunpack.c.l.b16 %v30
  %v337 = vunpack.c.l.b16 %v31
  %v338 = vunpack.c.l.b16 %v32
  %v339 = vunpack.c.l.b16 %v33
  %v340 = vunpack.c.l.b16 %v34
  %v341 = vunpack.c.l.b16 %v35
  %v342 = vunpack.c.l.b16 %v36
  %v343 = vunpack.c.l.b16 %v37
  %v344 = vunpack.c.l.b16 %v38
  %v345 = vunpack.c.l.b16 %v39
  %v346 = vunpack.c.l.b16 %v40
  %v347 = vunpack.c.l.b16 %v41
  %v348 = vunpack.c.l.b16 %v42
  %v349 = vunpack.c.l.b16 %v43
  %v350 = vunpack.c.l.b16 %v44
  %v351 = vunpack.c.l.b16 %v45
  %v352 = vunpack.c.l.b16 %v46
  %v353 = vunpack.c.l.b16 %v47
  %v354 = vunpack.c.l.b16 %v48
  %v355 = vunpack.c.l.b16 %v49
  %v356 = vunpack.c.l.b16 %v50
  %v357 = vunpack.c.l.b16 %v51
  %v358 = vunpack.c.l.b16 %v52
  %v359 = vunpack.c.l.b16 %v53
  %v360 = vunpack.c.l.b16 %v54
  %v361 = vunpack.c.l.b16 %v55
  %v362 = vunpack.c.l.b16 %v56
  %v363 = vunpack.c.l.b16 %v57
  %v364 = vunpack.c.l.b16 %v58
  %v365 = vunpack.c.l.b16 %v59
  %v366 = vunpack.c.l.b16 %v60
  %v367 = vunpack.c.l.b16 %v61
  %v368 = vunpack.c.l.b16 %v62
  %v369 = vunpack.c.l.b16 %v63
  %v370 = vunpack.c.l.b16 %v64
  %v371 = vunpack.c.l.b16 %v65
  %v372 = vunpack.c.l.b16 %v66
  %v373 = vunpack.c.l.b16 %v67
  %v374 = vunpack.c.l.b16 %v68
  %v375 = vunpack.c.l.b16 %v69
  %v376 = vunpack.c.l.b16 %v70
  %v377 = vunpack.c.l.b16 %v71
  %v378 = vunpack.c.l.b16 %v72
  %v379 = vunpack.c.l.b16 %v73
  %v380 = vunpack.c.l.b16 %v74
  %v381 = vunpack.c.l.b16 %v75
  %v382 = vunpack.c.l.b16 %v76
  %v383 = vunpack.c.l.b16 %v77
  %v384 = vunpack.c.l.b16 %v78
  %v385 = vunpack.c.l.b16 %v79
  %v386 = vunpack.c.l.b16 %v80
  %v387 = vunpack.c.l.b16 %v81
  %v388 = vunpack.c.l.b16 %v82
  %v389 = vunpack.c.l.b16 %v83
  %v390 = vunpack.c.l.b16 %v84
  %v391 = vunpack.c.l.b16 %v85
  %v392 = vunpack.c.l.b16 %v86
  %v393 = vunpack.c.l.b16 %v87
  %v394 = vunpack.c.l.b16 %v88
  %v395 = vunpack.c.l.b16 %v89
  %v396 = vunpack.c.l.b16 %v90
  %v397 = vunpack.c.l.b16 %v91
  %v398 = vunpack.c.l.b16 %v92
  %v399 = vunpack.c.l.b16 %v93
  %v400 = vunpack.c.l.b16 %v94
  %v401 = vunpack.c.l.b16 %v95
  %v402 = vunpack.c.l.b16 %v96
  %v403 = vunpack.c.l.b16 %v97
  %v404 = vunpack.c.l.b16 %v98
  %v405 = vunpack.c.l.b16 %v99
  %v406 = vunpack.c.l.b16 %v100
  %v407 = vunpack.c.l.b16 %v101
  %v408 = vunpack.c.l.b16 %v102
  %v409 = vunpack.c.l.b16 %v103
  %v410 = vunpack.c.l.b16 %v104
  %v411 = vunpack.c.l.b16 %v105
  %v412 = vunpack.c.l.b16 %v106
  %v413 = vunpack.c.l.b16 %v107
  %v414 = vunpack.c.l.b16 %v108
  %v415 = vunpack.c.l.b16 %v109
  %v416 = vunpack.c.l.b16 %v110
  %v417 = vunpack.c.l.b16 %v111
  %v418 = vunpack.c.l.b16 %v112
  %v419 = vunpack.c.l.b16 %v113
  %v420 = vunpack.c.l.b16 %v114
  %v421 = vunpack.c.l.b16 %v115
  %v422 = vunpack.c.l.b16 %v116
  %v423 = vunpack.c.l.b16 %v117
  %v424 = vunpack.c.l.b16 %v118
  %v425 = vunpack.c.l.b16 %v119
  %v426 = vunpack.c.l.b16 %v120
  %v427 = vunpack.c.l.b16 %v121
  %v428 = vunpack.c.l.b16 %v122
  %v429 = vunpack.c.l.b16 %v123
  %v430 = vunpack.c.l.b16 %v124
  %v431 = vpack.c.b16 %v334, %v333
  %v432 = vpack.c.b16 %v336, %v335
  %v433 = vpack.c.b16 %v338, %v337
  %v434 = vpack.c.b16 %v340, %v339
  %v435 = vpack.c.b16 %v342, %v341
  %v436 = vpack.c.b16 %v344, %v343
  %v437 = vpack.c.b16 %v346, %v345
  %v438 = vpack.c.b16 %v348, %v347
  %v439 = vpack.c.b16 %v350, %v349
  %v440 = vpack.c.b16 %v352, %v351
  %v441 = vpack.c.b16 %v354, %v353
  %v442 = vpack.c.b16 %v356, %v355
  %v443 = vpack.c.b16 %v358, %v357
  %v444 = vpack.c.b16 %v360, %v359
  %v445 = vpack.c.b16 %v362, %v361
  %v446 = vpack.c.b16 %v364, %v363
  %v447 = vpack.c.b16 %v366, %v365
  %v448 = vpack.c.b16 %v368, %v367
  %v449 = vpack.c.b16 %v370, %v369
  %v450 = vpack.c.b16 %v372, %v371
  %v451 = vpack.c.b16 %v374, %v373
  %v452 = vpack.c.b16 %v376, %v375
  %v453 = vpack.c.b16 %v378, %v377
  %v454 = vpack.c.b16 %v380, %v379
  %v455 = vpack.c.b16 %v382, %v381
  %v456 = vpack.c.b16 %v384, %v383
  %v457 = vpack.c.b16 %v386, %v385
  %v458 = vpack.c.b16 %v388, %v387
  %v459 = vpack.c.b16 %v390, %v389
  %v460 = vpack.c.b16 %v392, %v391
  %v461 = vpack.c.b16 %v394, %v393
  %v462 = vpack.c.b16 %v396, %v395
  %v463 = vpack.c.b16 %v398, %v397
  %v464 = vpack.c.b16 %v400, %v399
  %v465 = vpack.c.b16 %v402, %v401
  %v466 = vpack.c.b16 %v404, %v403
  %v467 = vpack.c.b16 %v406, %v405
  %v468 = vpack.c.b16 %v408, %v407
  %v469 = vpack.c.b16 %v410, %v409
  %v470 = vpack.c.b16 %v412, %v411
  %v471 = vpack.c.b16 %v414, %v413
  %v472 = vpack.c.b16 %v416, %v415
  %v473 = vpack.c.b16 %v418, %v417
  %v474 = vpack.c.b16 %v420, %v419
  %v475 = vpack.c.b16 %v422, %v421
  %v476 = vpack.c.b16 %v424, %v423
  %v477 = vpack.c.b16 %v426, %v425
  %v478 = vpack.c.b16 %v428, %v427
  %v479 = vpack.c.b16 %v430, %v429
  %vm529 = vcmask 130048
  %v531 = vsel %vm529, %v215, 0
  %v534 = vsel %vm529, %v222, 0
  %536 = vmatprep.subr.bf16.mxu0 0
  %537 = vmatpush1.bf16.msra.mxu0 %v438
  %538 = vmatprep.subr.bf16.mxu0 0
  %539 = vmatpush1.bf16.msra.mxu0 %v437
  %540 = vmatprep.subr.bf16.mxu0 0
  %541 = vmatpush1.bf16.msra.mxu0 %v436
  %542 = vmatprep.subr.bf16.mxu0 0
  %543 = vmatpush1.bf16.msra.mxu0 %v435
  %544 = vmatprep.subr.bf16.mxu0 0
  %545 = vmatpush1.bf16.msra.mxu0 %v434
  %546 = vmatprep.subr.bf16.mxu0 0
  %547 = vmatpush1.bf16.msra.mxu0 %v433
  %548 = vmatprep.subr.bf16.mxu0 0
  %549 = vmatpush1.bf16.msra.mxu0 %v432
  %550 = vmatprep.subr.bf16.mxu0 0
  %551 = vmatpush1.bf16.msra.mxu0 %v431
  %552 = vmatprep.subr.bf16.mxu0 0
  %553 = vmatpush2.bf16.msra.mxu0 %v446
  %554 = vmatprep.subr.bf16.mxu0 0
  %555 = vmatpush2.bf16.msra.mxu0 %v445
  %556 = vmatprep.subr.bf16.mxu0 0
  %557 = vmatpush2.bf16.msra.mxu0 %v444
  %558 = vmatprep.subr.bf16.mxu0 0
  %559 = vmatpush2.bf16.msra.mxu0 %v443
  %560 = vmatprep.subr.bf16.mxu0 0
  %561 = vmatpush2.bf16.msra.mxu0 %v442
  %562 = vmatprep.subr.bf16.mxu0 0
  %563 = vmatpush2.bf16.msra.mxu0 %v441
  %564 = vmatprep.subr.bf16.mxu0 0
  %565 = vmatpush2.bf16.msra.mxu0 %v440
  %566 = vmatprep.subr.bf16.mxu0 0
  %567 = vmatpush2.bf16.msra.mxu0 %v439
  %568 = vmatprep.mubr.bf16.mxu0 %v210
  %569 = vmatmul.mubr.bf16.gmra.mxu0 %v209
  %v570 = vpop.f32.mrf.mxu0
  %v571 = vadd.f32 %v148, %v570
  %v572 = vpop.f32.mrf.mxu0
  %v573 = vpop.f32.mrf.mxu0
  %v574 = vadd.f32 %v153, %v573
  %v575 = vpop.f32.mrf.mxu0
  %576 = vmatprep.mubr.bf16.mxu0 %v217
  %577 = vmatmul.mubr.bf16.gmra.mxu0 %v216
  %v578 = vpop.f32.mrf.mxu0
  %v579 = vadd.f32 %v158, %v578
  %v580 = vpop.f32.mrf.mxu0
  %v581 = vpop.f32.mrf.mxu0
  %v582 = vadd.f32 %v163, %v581
  %v583 = vpop.f32.mrf.mxu0
  %584 = vdwg.mxu0
  %585 = vmatprep.subr.bf16.mxu0 0
  %586 = vmatpush1.bf16.msra.mxu0 %v454
  %587 = vmatprep.subr.bf16.mxu0 0
  %588 = vmatpush1.bf16.msra.mxu0 %v453
  %589 = vmatprep.subr.bf16.mxu0 0
  %590 = vmatpush1.bf16.msra.mxu0 %v452
  %591 = vmatprep.subr.bf16.mxu0 0
  %592 = vmatpush1.bf16.msra.mxu0 %v451
  %593 = vmatprep.subr.bf16.mxu0 0
  %594 = vmatpush1.bf16.msra.mxu0 %v450
  %595 = vmatprep.subr.bf16.mxu0 0
  %596 = vmatpush1.bf16.msra.mxu0 %v449
  %597 = vmatprep.subr.bf16.mxu0 0
  %598 = vmatpush1.bf16.msra.mxu0 %v448
  %599 = vmatprep.subr.bf16.mxu0 0
  %600 = vmatpush1.bf16.msra.mxu0 %v447
  %601 = vmatprep.subr.bf16.mxu0 0
  %602 = vmatpush2.bf16.msra.mxu0 %v462
  %603 = vmatprep.subr.bf16.mxu0 0
  %604 = vmatpush2.bf16.msra.mxu0 %v461
  %605 = vmatprep.subr.bf16.mxu0 0
  %606 = vmatpush2.bf16.msra.mxu0 %v460
  %607 = vmatprep.subr.bf16.mxu0 0
  %608 = vmatpush2.bf16.msra.mxu0 %v459
  %609 = vmatprep.subr.bf16.mxu0 0
  %610 = vmatpush2.bf16.msra.mxu0 %v458
  %611 = vmatprep.subr.bf16.mxu0 0
  %612 = vmatpush2.bf16.msra.mxu0 %v457
  %613 = vmatprep.subr.bf16.mxu0 0
  %614 = vmatpush2.bf16.msra.mxu0 %v456
  %615 = vmatprep.subr.bf16.mxu0 0
  %616 = vmatpush2.bf16.msra.mxu0 %v455
  %617 = vmatprep.mubr.bf16.mxu0 %v212
  %618 = vmatmul.mubr.bf16.gmra.mxu0 %v211
  %v619 = vpop.f32.mrf.mxu0
  %v620 = vadd.f32 %v571, %v619
  %v621 = vpop.f32.mrf.mxu0
  %v622 = vpop.f32.mrf.mxu0
  %v623 = vadd.f32 %v574, %v622
  %v624 = vpop.f32.mrf.mxu0
  %625 = vmatprep.mubr.bf16.mxu0 %v219
  %626 = vmatmul.mubr.bf16.gmra.mxu0 %v218
  %v627 = vpop.f32.mrf.mxu0
  %v628 = vadd.f32 %v579, %v627
  %v629 = vpop.f32.mrf.mxu0
  %v630 = vpop.f32.mrf.mxu0
  %v631 = vadd.f32 %v582, %v630
  %v632 = vpop.f32.mrf.mxu0
  %633 = vdwg.mxu0
  %634 = vmatprep.subr.bf16.mxu0 0
  %635 = vmatpush1.bf16.msra.mxu0 %v470
  %636 = vmatprep.subr.bf16.mxu0 0
  %637 = vmatpush1.bf16.msra.mxu0 %v469
  %638 = vmatprep.subr.bf16.mxu0 0
  %639 = vmatpush1.bf16.msra.mxu0 %v468
  %640 = vmatprep.subr.bf16.mxu0 0
  %641 = vmatpush1.bf16.msra.mxu0 %v467
  %642 = vmatprep.subr.bf16.mxu0 0
  %643 = vmatpush1.bf16.msra.mxu0 %v466
  %644 = vmatprep.subr.bf16.mxu0 0
  %645 = vmatpush1.bf16.msra.mxu0 %v465
  %646 = vmatprep.subr.bf16.mxu0 0
  %647 = vmatpush1.bf16.msra.mxu0 %v464
  %648 = vmatprep.subr.bf16.mxu0 0
  %649 = vmatpush1.bf16.msra.mxu0 %v463
  %650 = vmatprep.subr.bf16.mxu0 0
  %651 = vmatpush2.bf16.msra.mxu0 %v478
  %652 = vmatprep.subr.bf16.mxu0 0
  %653 = vmatpush2.bf16.msra.mxu0 %v477
  %654 = vmatprep.subr.bf16.mxu0 0
  %655 = vmatpush2.bf16.msra.mxu0 %v476
  %656 = vmatprep.subr.bf16.mxu0 0
  %657 = vmatpush2.bf16.msra.mxu0 %v475
  %658 = vmatprep.subr.bf16.mxu0 0
  %659 = vmatpush2.bf16.msra.mxu0 %v474
  %660 = vmatprep.subr.bf16.mxu0 0
  %661 = vmatpush2.bf16.msra.mxu0 %v473
  %662 = vmatprep.subr.bf16.mxu0 0
  %663 = vmatpush2.bf16.msra.mxu0 %v472
  %664 = vmatprep.subr.bf16.mxu0 0
  %665 = vmatpush2.bf16.msra.mxu0 %v471
  %666 = vmatprep.mubr.bf16.mxu0 %v214
  %667 = vmatmul.mubr.bf16.gmra.mxu0 %v213
  %v668 = vpop.f32.mrf.mxu0
  %v669 = vadd.f32 %v620, %v668
  %v670 = vpop.f32.mrf.mxu0
  %v671 = vpop.f32.mrf.mxu0
  %v672 = vadd.f32 %v623, %v671
  %v673 = vpop.f32.mrf.mxu0
  %674 = vmatprep.mubr.bf16.mxu0 %v221
  %675 = vmatmul.mubr.bf16.gmra.mxu0 %v220
  %v676 = vpop.f32.mrf.mxu0
  %v677 = vadd.f32 %v628, %v676
  %v678 = vpop.f32.mrf.mxu0
  %v679 = vpop.f32.mrf.mxu0
  %v680 = vadd.f32 %v631, %v679
  %v681 = vpop.f32.mrf.mxu0
  %682 = vdwg.mxu0
  %683 = vmatprep.subr.bf16.mxu0 0
  %684 = vmatpush1.bf16.msra.mxu0 0
  %685 = vmatprep.subr.bf16.mxu0 0
  %686 = vmatpush1.bf16.msra.mxu0 0
  %687 = vmatprep.subr.bf16.mxu0 0
  %688 = vmatpush1.bf16.msra.mxu0 0
  %689 = vmatprep.subr.bf16.mxu0 0
  %690 = vmatpush1.bf16.msra.mxu0 0
  %691 = vmatprep.subr.bf16.mxu0 0
  %692 = vmatpush1.bf16.msra.mxu0 0
  %693 = vmatprep.subr.bf16.mxu0 0
  %694 = vmatpush1.bf16.msra.mxu0 0
  %695 = vmatprep.subr.bf16.mxu0 0
  %696 = vmatpush1.bf16.msra.mxu0 0
  %697 = vmatprep.subr.bf16.mxu0 0
  %698 = vmatpush1.bf16.msra.mxu0 %v479
  %699 = vmatprep.subr.bf16.mxu0 0
  %700 = vmatpush2.bf16.msra.mxu0 0
  %701 = vmatprep.subr.bf16.mxu0 0
  %702 = vmatpush2.bf16.msra.mxu0 0
  %703 = vmatprep.subr.bf16.mxu0 0
  %704 = vmatpush2.bf16.msra.mxu0 0
  %705 = vmatprep.subr.bf16.mxu0 0
  %706 = vmatpush2.bf16.msra.mxu0 0
  %707 = vmatprep.subr.bf16.mxu0 0
  %708 = vmatpush2.bf16.msra.mxu0 0
  %709 = vmatprep.subr.bf16.mxu0 0
  %710 = vmatpush2.bf16.msra.mxu0 0
  %711 = vmatprep.subr.bf16.mxu0 0
  %712 = vmatpush2.bf16.msra.mxu0 0
  %713 = vmatprep.subr.bf16.mxu0 0
  %714 = vmatpush2.bf16.msra.mxu0 0
  %715 = vmatprep.mubr.bf16.mxu0 0
  %716 = vmatmul.mubr.bf16.gmra.mxu0 %v531
  %v717 = vpop.f32.mrf.mxu0
  %v718 = vadd.f32 %v669, %v717
  %v719 = vpop.f32.mrf.mxu0
  %v720 = vpop.f32.mrf.mxu0
  %v721 = vadd.f32 %v672, %v720
  %v722 = vpop.f32.mrf.mxu0
  %723 = vmatprep.mubr.bf16.mxu0 0
  %724 = vmatmul.mubr.bf16.gmra.mxu0 %v534
  %v725 = vpop.f32.mrf.mxu0
  %v726 = vadd.f32 %v677, %v725
  %v727 = vpop.f32.mrf.mxu0
  %v728 = vpop.f32.mrf.mxu0
  %v729 = vadd.f32 %v680, %v728
  %v730 = vpop.f32.mrf.mxu0
  %731 = vdwg.mxu0
  %v732 = vmax.f32 %v718, 0.0
  %v733 = vmax.f32 %v721, 0.0
  %v734 = vmax.f32 %v726, 0.0
  %v735 = vmax.f32 %v729, 0.0
  %v736 = vpack.c.bf16 %v733, %v732
  %v737 = vpack.c.bf16 %v735, %v734
  %v738 = vld [vmem:[%s3] sm:$0xf]
  %v739 = vld [vmem:[%s3 + $0x4] sm:$0xf]
  %v740 = vld [vmem:[%s3 + $0x8] sm:$0xf]
  %v741 = vld [vmem:[%s3 + $0xc] sm:$0xf]
  %v742 = vld [vmem:[%s4] sm:$0xff]
  %v743 = vld [vmem:[%s4 + $0x8] sm:$0xff]
  %v744 = vld [vmem:[%s4 + $0x10] sm:$0xff]
  %v745 = vld [vmem:[%s4 + $0x18] sm:$0xff]
  %747 = vset.pattern.permute.xlu0 0
  %748 = vperm.xlu0 %747, %v742
  %v749 = vpop.permute.xlu0 %748
  %752 = vset.pattern.permute.xlu0 0
  %753 = vperm.xlu0 %752, %v743
  %v754 = vpop.permute.xlu0 %753
  %757 = vset.pattern.permute.xlu0 0
  %758 = vperm.xlu0 %757, %v744
  %v759 = vpop.permute.xlu0 %758
  %762 = vset.pattern.permute.xlu0 0
  %763 = vperm.xlu0 %762, %v745
  %v764 = vpop.permute.xlu0 %763
  %v770 = vunpack.c.l.b16 %v738
  %v771 = vunpack.c.l.b16 %v739
  %v772 = vunpack.c.l.b16 %v740
  %v773 = vunpack.c.l.b16 %v741
  %v774 = vpack.c.b16 %v771, %v770
  %v775 = vpack.c.b16 %v773, %v772
  %vm776 = vcmask 261120
  %v778 = vsel %vm776, %v774, 0
  %v781 = vsel %vm776, %v775, 0
  %783 = vmatprep.subr.bf16.mxu0 0
  %784 = vmatpush1.bf16.msra.mxu0 0
  %785 = vmatprep.subr.bf16.mxu0 0
  %786 = vmatpush1.bf16.msra.mxu0 0
  %787 = vmatprep.subr.bf16.mxu0 0
  %788 = vmatpush1.bf16.msra.mxu0 0
  %789 = vmatprep.subr.bf16.mxu0 0
  %790 = vmatpush1.bf16.msra.mxu0 0
  %791 = vmatprep.subr.bf16.mxu0 0
  %792 = vmatpush1.bf16.msra.mxu0 0
  %793 = vmatprep.subr.bf16.mxu0 0
  %794 = vmatpush1.bf16.msra.mxu0 0
  %795 = vmatprep.subr.bf16.mxu0 0
  %796 = vmatpush1.bf16.msra.mxu0 %v737
  %797 = vmatprep.subr.bf16.mxu0 0
  %798 = vmatpush1.bf16.msra.mxu0 %v736
  %799 = vmatprep.subr.bf16.mxu0 0
  %800 = vmatpush2.bf16.msra.mxu0 0
  %801 = vmatprep.subr.bf16.mxu0 0
  %802 = vmatpush2.bf16.msra.mxu0 0
  %803 = vmatprep.subr.bf16.mxu0 0
  %804 = vmatpush2.bf16.msra.mxu0 0
  %805 = vmatprep.subr.bf16.mxu0 0
  %806 = vmatpush2.bf16.msra.mxu0 0
  %807 = vmatprep.subr.bf16.mxu0 0
  %808 = vmatpush2.bf16.msra.mxu0 0
  %809 = vmatprep.subr.bf16.mxu0 0
  %810 = vmatpush2.bf16.msra.mxu0 0
  %811 = vmatprep.subr.bf16.mxu0 0
  %812 = vmatpush2.bf16.msra.mxu0 0
  %813 = vmatprep.subr.bf16.mxu0 0
  %814 = vmatpush2.bf16.msra.mxu0 0
  %815 = vmatprep.mubr.bf16.mxu0 0
  %816 = vmatmul.mubr.bf16.gmra.mxu0 %v778
  %v817 = vpop.f32.mrf.mxu0
  %v818 = vadd.f32 %v749, %v817
  %v819 = vpop.f32.mrf.mxu0
  %v820 = vpop.f32.mrf.mxu0
  %v821 = vadd.f32 %v754, %v820
  %v822 = vpop.f32.mrf.mxu0
  %823 = vmatprep.mubr.bf16.mxu0 0
  %824 = vmatmul.mubr.bf16.gmra.mxu0 %v781
  %v825 = vpop.f32.mrf.mxu0
  %v826 = vadd.f32 %v759, %v825
  %v827 = vpop.f32.mrf.mxu0
  %v828 = vpop.f32.mrf.mxu0
  %v829 = vadd.f32 %v764, %v828
  %v830 = vpop.f32.mrf.mxu0
  %831 = vdwg.mxu0
  %v832 = vmax.f32 %v818, 0.0
  %v833 = vmax.f32 %v821, 0.0
  %v834 = vmax.f32 %v826, 0.0
  %v835 = vmax.f32 %v829, 0.0
  %v836 = vpack.c.bf16 %v833, %v832
  %v837 = vpack.c.bf16 %v835, %v834
  %v838 = vld [vmem:[%s5] sm:$0xf]
  %v839 = vld [vmem:[%s5 + $0x4] sm:$0x1]
  %v840 = vld [vmem:[%s6] sm:$0xff]
  %v841 = vld [vmem:[%s6 + $0x8] sm:$0x3]
  %843 = vset.pattern.permute.xlu0 0
  %844 = vperm.xlu0 %843, %v840
  %v845 = vpop.permute.xlu0 %844
  %848 = vset.pattern.permute.xlu0 0
  %849 = vperm.xlu0 %848, %v841
  %v850 = vpop.permute.xlu0 %849
  %v854 = vunpack.c.l.b16 %v838
  %v855 = vunpack.c.l.b16 %v839
  %v856 = vpack.c.b16 %v855, %v854
  %v858 = vsel %vm776, %v856, 0
  %860 = vmatprep.subr.bf16.mxu0 0
  %861 = vmatpush1.bf16.msra.mxu0 0
  %862 = vmatprep.subr.bf16.mxu0 0
  %863 = vmatpush1.bf16.msra.mxu0 0
  %864 = vmatprep.subr.bf16.mxu0 0
  %865 = vmatpush1.bf16.msra.mxu0 0
  %866 = vmatprep.subr.bf16.mxu0 0
  %867 = vmatpush1.bf16.msra.mxu0 0
  %868 = vmatprep.subr.bf16.mxu0 0
  %869 = vmatpush1.bf16.msra.mxu0 0
  %870 = vmatprep.subr.bf16.mxu0 0
  %871 = vmatpush1.bf16.msra.mxu0 0
  %872 = vmatprep.subr.bf16.mxu0 0
  %873 = vmatpush1.bf16.msra.mxu0 %v837
  %874 = vmatprep.subr.bf16.mxu0 0
  %875 = vmatpush1.bf16.msra.mxu0 %v836
  %876 = vmatprep.subr.bf16.mxu0 0
  %877 = vmatpush2.bf16.msra.mxu0 0
  %878 = vmatprep.subr.bf16.mxu0 0
  %879 = vmatpush2.bf16.msra.mxu0 0
  %880 = vmatprep.subr.bf16.mxu0 0
  %881 = vmatpush2.bf16.msra.mxu0 0
  %882 = vmatprep.subr.bf16.mxu0 0
  %883 = vmatpush2.bf16.msra.mxu0 0
  %884 = vmatprep.subr.bf16.mxu0 0
  %885 = vmatpush2.bf16.msra.mxu0 0
  %886 = vmatprep.subr.bf16.mxu0 0
  %887 = vmatpush2.bf16.msra.mxu0 0
  %888 = vmatprep.subr.bf16.mxu0 0
  %889 = vmatpush2.bf16.msra.mxu0 0
  %890 = vmatprep.subr.bf16.mxu0 0
  %891 = vmatpush2.bf16.msra.mxu0 0
  %892 = vmatprep.mubr.bf16.mxu0 0
  %893 = vmatmul.mubr.bf16.gmra.mxu0 %v858
  %v894 = vpop.f32.mrf.mxu0
  %v895 = vadd.f32 %v845, %v894
  %v896 = vpop.f32.mrf.mxu0
  %v897 = vpop.f32.mrf.mxu0
  %v898 = vadd.f32 %v850, %v897
  %v899 = vpop.f32.mrf.mxu0
  %900 = vdwg.mxu0
  %vm901 = vcmask 64512
  %902 = vst.msk [vmem:[%s7] sm:$0xff] %vm901, %v895
  %vm903 = vcmask 58368
  %904 = vst.msk [vmem:[%s7 + $0x8] sm:$0x3] %vm903, %v898
  // Predicated region
  $region30: #{mlp_forward.2} parent=0 // pred_check
    _
  $region31: #{mlp_forward.2} parent=0 // pred_check_branch
    %906 = sbr.rel (0) target = $region33
  $region32: #{mlp_forward.2} parent=0 // pred_region
    _
  $region33: #{mlp_forward.2} parent=0 // pred_fallthru
    _
  // Predicated region
  $region34: #{mlp_forward.2} parent=0 // pred_check
    _
  $region35: #{mlp_forward.2} parent=0 // pred_check_branch
    %908 = sbr.rel (0) target = $region37
  $region36: #{mlp_forward.2} parent=0 // pred_region
    _
  $region37: #{mlp_forward.2} parent=0 // pred_fallthru
    _

</llo_original>
